<compile_context>
chip_gen: v5e
topology: v5e:2x2
jax: 0.10.0
libtpu: 0.0.40
codegen_flags: <defaults>
</compile_context>

<pallas_src>
import functools

import jax
import jax.numpy as jnp
from jax import lax
from jax.experimental import pallas as pl
from jax.experimental.pallas import tpu as pltpu


def _sdpa_kernel(q_ref, k_ref, v_ref, *rest, inv_temperature, has_mask):
    if has_mask:
        mask_ref, out_ref, energies_ref, attn_ref = rest
    else:
        mask_ref = None
        out_ref, energies_ref, attn_ref = rest

    # Fold 1/temperature into q: scales TQ*D elements instead of TQ*Lk energies.
    q = q_ref[0] * inv_temperature          # (TQ, D)
    k = k_ref[0]                            # (Lk, D)
    v = v_ref[0]                            # (Lk, Dv)

    # energies = (q / T) @ k^T without materializing k.T: contract the last axis of both.
    e = lax.dot_general(
        q, k, dimension_numbers=(((1,), (1,)), ((), ())),
        preferred_element_type=jnp.float32)  # (TQ, Lk) f32

    if has_mask:
        m = mask_ref[0]                      # (TQ, Lk) or (1, Lk) int8; broadcasts over rows
        e = jnp.where(m != 0, -jnp.inf, e)

    energies_ref[0] = e.astype(energies_ref.dtype)

    # softmax over the key axis (dim=2 of the full tensor). Fully-masked rows yield NaN,
    # matching torch's masked_fill(-inf) + softmax behavior.
    e_max = jnp.max(e, axis=-1, keepdims=True)
    p = jnp.exp(e - e_max)
    denom = jnp.sum(p, axis=-1, keepdims=True)
    attn = p * pl.reciprocal(denom, approx=False)
    # Dropout(p=0.1): eval-mode identity (deterministic forward).
    # TODO(synk): training-mode dropout would use pltpu.prng_seed / prng_random_bits.
    attn_ref[0] = attn.astype(attn_ref.dtype)

    # output = attn @ v
    out_ref[0] = jnp.dot(attn.astype(v.dtype), v,
                         preferred_element_type=jnp.float32).astype(out_ref.dtype)


def _step_vmem_bytes(tq, Lk, D, Dv, in_bytes, out_bytes, mask_rows, mask_bytes):
    per_step = (
        tq * D * in_bytes              # q tile
        + Lk * D * in_bytes            # k (full keys per step)
        + Lk * Dv * in_bytes           # v (full keys per step)
        + mask_rows * Lk * mask_bytes  # int8 mask tile (0 if no mask)
        + tq * Dv * out_bytes          # output tile
        + 2 * tq * Lk * out_bytes      # energies + attn tiles
    )
    return 2 * per_step                # double-buffered pipeline


def scaled_dot_product_attention(q, k, v, temperature, mask=None, *, query_block=None):
    """q: [B,Lq,D], k: [B,Lk,D], v: [B,Lk,Dv].
    mask (optional): bool-ish, shape [B,Lq,Lk] or [B,1,Lk] (per-key mask)."""
    B, Lq, D = q.shape
    _, Lk, _ = k.shape
    Dv = v.shape[-1]
    out_dtype = q.dtype

    has_mask = mask is not None
    mask_per_query = False
    mask_i8 = None
    if has_mask:
        mask_i8 = mask.astype(jnp.int8)
        if mask_i8.ndim == 2:                   # [B, Lk] -> key mask
            mask_i8 = mask_i8[:, None, :]
        mq = mask_i8.shape[1]
        assert mask_i8.shape == (B, mq, Lk) and mq in (1, Lq), "unsupported mask shape"
        mask_per_query = (mq == Lq)

    in_bytes = jnp.dtype(q.dtype).itemsize
    out_bytes = jnp.dtype(out_dtype).itemsize
    mask_bytes = 1 if has_mask else 0

    def step_bytes(tq):
        mrows = tq if mask_per_query else (1 if has_mask else 0)
        return _step_vmem_bytes(tq, Lk, D, Dv, in_bytes, out_bytes, mrows, mask_bytes)

    # Pick the largest Lq tile whose double-buffered working set stays under a
    # v7x-safe VMEM budget (~40 MiB of 64 MiB physical). Tiles are multiples of 32
    # so int8 mask / (b)f16 input sublane tiling constraints are always satisfied.
    if query_block is not None:
        TQ = int(query_block)
        assert Lq % TQ == 0 and (TQ == Lq or TQ % 32 == 0)
    else:
        budget = 40 << 20
        candidates = [Lq] + [c for c in (1024, 512, 256, 128, 64, 32)
                             if c < Lq and Lq % c == 0]
        fitting = [c for c in candidates if step_bytes(c) <= budget]
        TQ = max(fitting) if fitting else min(candidates)

    grid = (B, Lq // TQ)

    in_specs = [
        pl.BlockSpec((1, TQ, D), lambda b, i: (b, i, 0)),    # q tile
        pl.BlockSpec((1, Lk, D), lambda b, i: (b, 0, 0)),    # k (all keys)
        pl.BlockSpec((1, Lk, Dv), lambda b, i: (b, 0, 0)),   # v (all keys)
    ]
    inputs = [q, k, v]
    if has_mask:
        if mask_per_query:
            in_specs.append(pl.BlockSpec((1, TQ, Lk), lambda b, i: (b, i, 0)))
        else:
            in_specs.append(pl.BlockSpec((1, 1, Lk), lambda b, i: (b, 0, 0)))
        inputs.append(mask_i8)

    out_specs = [
        pl.BlockSpec((1, TQ, Dv), lambda b, i: (b, i, 0)),   # output
        pl.BlockSpec((1, TQ, Lk), lambda b, i: (b, i, 0)),   # energies
        pl.BlockSpec((1, TQ, Lk), lambda b, i: (b, i, 0)),   # attn
    ]
    out_shapes = (
        jax.ShapeDtypeStruct((B, Lq, Dv), out_dtype),
        jax.ShapeDtypeStruct((B, Lq, Lk), out_dtype),
        jax.ShapeDtypeStruct((B, Lq, Lk), out_dtype),
    )

    # Explicit scoped-VMEM limit derived from the actual tile working set
    # (default scoped limit is only 16/32 MiB on v5e / v6e+v7x).
    vmem_limit = int(min(max(step_bytes(TQ) + (8 << 20), 32 << 20), 100 << 20))

    kernel = functools.partial(
        _sdpa_kernel,
        inv_temperature=1.0 / float(temperature),
        has_mask=has_mask,
    )

    return pl.pallas_call(
        kernel,
        out_shape=out_shapes,
        grid_spec=pltpu.PrefetchScalarGridSpec(
            num_scalar_prefetch=0,
            grid=grid,
            in_specs=in_specs,
            out_specs=out_specs,
        ),
        compiler_params=pltpu.CompilerParams(
            dimension_semantics=("parallel", "parallel"),
            vmem_limit_bytes=vmem_limit,
        ),
    )(*inputs)


def _reference(q, k, v, temperature, mask=None):
    e = jnp.einsum("bqd,bkd->bqk", q, k) / temperature
    if mask is not None:
        e = jnp.where(mask, -jnp.inf, e)
    a = jax.nn.softmax(e, axis=2)
    o = jnp.einsum("bqk,bkd->bqd", a, v)
    return o, e, a


if __name__ == "__main__":
    key = jax.random.PRNGKey(0)
    kq, kk, kv = jax.random.split(key, 3)

    # Small config consistent with the module: batch*(n_head)=2, seq 8, head dim 32.
    B, Lq, Lk, D, Dv = 2, 8, 8, 32, 32
    q = jax.random.normal(kq, (B, Lq, D), dtype=jnp.float32)
    k = jax.random.normal(kk, (B, Lk, D), dtype=jnp.float32)
    v = jax.random.normal(kv, (B, Lk, Dv), dtype=jnp.float32)
    temperature = float(D) ** 0.5

    def check(outs, refs):
        o, e, a = outs
        o_r, e_r, a_r = refs
        assert jnp.allclose(e, e_r, atol=1e-4, rtol=1e-4)
        assert jnp.allclose(a, a_r, atol=1e-5, rtol=1e-5)
        assert jnp.allclose(o, o_r, atol=1e-4, rtol=1e-4)

    # 1) Full (B, Lq, Lk) boolean mask (mask out the last key everywhere).
    full_mask = jnp.zeros((B, Lq, Lk), dtype=jnp.bool_).at[:, :, -1].set(True)
    outs = scaled_dot_product_attention(q, k, v, temperature, mask=full_mask)
    jax.block_until_ready(outs)
    check(outs, _reference(q, k, v, temperature, full_mask))

    # 2) Key-only (B, 1, Lk) mask — streamed without broadcasting in HBM.
    key_mask = jnp.zeros((B, 1, Lk), dtype=jnp.bool_).at[:, :, -1].set(True)
    outs = scaled_dot_product_attention(q, k, v, temperature, mask=key_mask)
    jax.block_until_ready(outs)
    check(outs, _reference(q, k, v, temperature, key_mask))

    # 3) No mask — no mask DMA at all.
    outs = scaled_dot_product_attention(q, k, v, temperature, mask=None)
    jax.block_until_ready(outs)
    check(outs, _reference(q, k, v, temperature, None))

    # 4) Exercise the tiled-Lq path explicitly: grid=(B, Lq//32).
    B2, L2 = 2, 64
    q2 = jax.random.normal(kq, (B2, L2, D), dtype=jnp.float32)
    k2 = jax.random.normal(kk, (B2, L2, D), dtype=jnp.float32)
    v2 = jax.random.normal(kv, (B2, L2, Dv), dtype=jnp.float32)
    m2 = jnp.zeros((B2, L2, L2), dtype=jnp.bool_).at[:, :, -1].set(True)
    outs2 = scaled_dot_product_attention(q2, k2, v2, temperature, mask=m2, query_block=32)
    jax.block_until_ready(outs2)
    check(outs2, _reference(q2, k2, v2, temperature, m2))

    print("KERNEL_OK")
</pallas_src>

<mosaic_0001>
module attributes {stable_mosaic.version = 11 : i64} {
  func.func @_sdpa_kernel(%arg0: i32, %arg1: i32, %arg2: memref<1x8x32xf32, #tpu.memory_space<vmem>>, %arg3: memref<1x8x32xf32, #tpu.memory_space<vmem>>, %arg4: memref<1x8x32xf32, #tpu.memory_space<vmem>>, %arg5: memref<1x8x8xi8, #tpu.memory_space<vmem>>, %arg6: memref<1x8x32xf32, #tpu.memory_space<vmem>>, %arg7: memref<1x8x8xf32, #tpu.memory_space<vmem>>, %arg8: memref<1x8x8xf32, #tpu.memory_space<vmem>>) attributes {dimension_semantics = [#tpu.dimension_semantics<parallel>, #tpu.dimension_semantics<parallel>], iteration_bounds = array<i64: 2, 1>, scalar_prefetch = 0 : i64, scratch_operands = 0 : i64, tpu.core_type = #tpu.core_type<tc>, window_params = [{transform_indices = @transform_0, window_bounds = array<i64: 1, 8, 32>}, {transform_indices = @transform_1, window_bounds = array<i64: 1, 8, 32>}, {transform_indices = @transform_2, window_bounds = array<i64: 1, 8, 32>}, {transform_indices = @transform_3, window_bounds = array<i64: 1, 8, 8>}, {transform_indices = @transform_4, window_bounds = array<i64: 1, 8, 32>}, {transform_indices = @transform_5, window_bounds = array<i64: 1, 8, 8>}, {transform_indices = @transform_6, window_bounds = array<i64: 1, 8, 8>}]} {
    %c0 = arith.constant 0 : index
    %c0_0 = arith.constant 0 : index
    %c0_1 = arith.constant 0 : index
    %0 = vector.load %arg2[%c0, %c0_0, %c0_1] : memref<1x8x32xf32, #tpu.memory_space<vmem>>, vector<1x8x32xf32>
    %1 = vector.shape_cast %0 : vector<1x8x32xf32> to vector<8x32xf32>
    %cst = arith.constant 0.176776692 : f32
    %2 = vector.broadcast %cst : f32 to vector<8x32xf32>
    %3 = arith.mulf %1, %2 : vector<8x32xf32>
    %c0_2 = arith.constant 0 : index
    %c0_3 = arith.constant 0 : index
    %c0_4 = arith.constant 0 : index
    %4 = vector.load %arg3[%c0_2, %c0_3, %c0_4] : memref<1x8x32xf32, #tpu.memory_space<vmem>>, vector<1x8x32xf32>
    %5 = vector.shape_cast %4 : vector<1x8x32xf32> to vector<8x32xf32>
    %c0_5 = arith.constant 0 : index
    %c0_6 = arith.constant 0 : index
    %c0_7 = arith.constant 0 : index
    %6 = vector.load %arg4[%c0_5, %c0_6, %c0_7] : memref<1x8x32xf32, #tpu.memory_space<vmem>>, vector<1x8x32xf32>
    %7 = vector.shape_cast %6 : vector<1x8x32xf32> to vector<8x32xf32>
    %cst_8 = arith.constant dense<0.000000e+00> : vector<8x8xf32>
    %8 = tpu.matmul %3, %5, %cst_8 {dimension_numbers = #tpu.dot_dimension_numbers<[1], [1], [0], [0], [0, 0, 1, 0], [], []>} : vector<8x32xf32>, vector<8x32xf32>, vector<8x8xf32> -> vector<8x8xf32>
    %c0_9 = arith.constant 0 : index
    %c0_10 = arith.constant 0 : index
    %c0_11 = arith.constant 0 : index
    %9 = vector.load %arg5[%c0_9, %c0_10, %c0_11] : memref<1x8x8xi8, #tpu.memory_space<vmem>>, vector<1x8x8xi8>
    %10 = vector.shape_cast %9 : vector<1x8x8xi8> to vector<8x8xi8>
    %c0_i8 = arith.constant 0 : i8
    %11 = vector.broadcast %c0_i8 : i8 to vector<8x8xi8>
    %12 = arith.cmpi ne, %10, %11 : vector<8x8xi8>
    %cst_12 = arith.constant 0xFF800000 : f32
    %13 = vector.broadcast %cst_12 : f32 to vector<8x8xf32>
    %14 = arith.select %12, %13, %8 : vector<8x8xi1>, vector<8x8xf32>
    %c0_13 = arith.constant 0 : index
    %c0_14 = arith.constant 0 : index
    %c0_15 = arith.constant 0 : index
    %15 = vector.load %arg7[%c0_13, %c0_14, %c0_15] : memref<1x8x8xf32, #tpu.memory_space<vmem>>, vector<1x8x8xf32>
    %16 = vector.shape_cast %15 : vector<1x8x8xf32> to vector<8x8xf32>
    %17 = vector.shape_cast %14 : vector<8x8xf32> to vector<1x8x8xf32>
    tpu.vector_store %arg7[%c0_13, %c0_14, %c0_15], %17 {strides = array<i32>} : memref<1x8x8xf32, #tpu.memory_space<vmem>>, vector<1x8x8xf32>,
    %cst_16 = arith.constant dense<0xFF800000> : vector<8xf32>
    %18 = vector.multi_reduction <maximumf>, %14, %cst_16 [1] : vector<8x8xf32> to vector<8xf32>
    %19 = vector.shape_cast %18 : vector<8xf32> to vector<8x1xf32>
    %20 = vector.broadcast %19 : vector<8x1xf32> to vector<8x8xf32>
    %21 = arith.subf %14, %20 : vector<8x8xf32>
    %22 = math.exp %21 : vector<8x8xf32>
    %cst_17 = arith.constant dense<0.000000e+00> : vector<8xf32>
    %23 = vector.multi_reduction <add>, %22, %cst_17 [1] : vector<8x8xf32> to vector<8xf32>
    %24 = vector.shape_cast %23 : vector<8xf32> to vector<8x1xf32>
    %25 = tpu.reciprocal %24 : vector<8x1xf32> -> vector<8x1xf32>
    %26 = vector.broadcast %25 : vector<8x1xf32> to vector<8x8xf32>
    %27 = arith.mulf %22, %26 : vector<8x8xf32>
    %c0_18 = arith.constant 0 : index
    %c0_19 = arith.constant 0 : index
    %c0_20 = arith.constant 0 : index
    %28 = vector.load %arg8[%c0_18, %c0_19, %c0_20] : memref<1x8x8xf32, #tpu.memory_space<vmem>>, vector<1x8x8xf32>
    %29 = vector.shape_cast %28 : vector<1x8x8xf32> to vector<8x8xf32>
    %30 = vector.shape_cast %27 : vector<8x8xf32> to vector<1x8x8xf32>
    tpu.vector_store %arg8[%c0_18, %c0_19, %c0_20], %30 {strides = array<i32>} : memref<1x8x8xf32, #tpu.memory_space<vmem>>, vector<1x8x8xf32>,
    %cst_21 = arith.constant dense<0.000000e+00> : vector<8x32xf32>
    %31 = tpu.matmul %27, %7, %cst_21 {dimension_numbers = #tpu.dot_dimension_numbers<[1], [0], [0], [1], [0, 0, 1, 1], [], []>} : vector<8x8xf32>, vector<8x32xf32>, vector<8x32xf32> -> vector<8x32xf32>
    %c0_22 = arith.constant 0 : index
    %c0_23 = arith.constant 0 : index
    %c0_24 = arith.constant 0 : index
    %32 = vector.load %arg6[%c0_22, %c0_23, %c0_24] : memref<1x8x32xf32, #tpu.memory_space<vmem>>, vector<1x8x32xf32>
    %33 = vector.shape_cast %32 : vector<1x8x32xf32> to vector<8x32xf32>
    %34 = vector.shape_cast %31 : vector<8x32xf32> to vector<1x8x32xf32>
    tpu.vector_store %arg6[%c0_22, %c0_23, %c0_24], %34 {strides = array<i32>} : memref<1x8x32xf32, #tpu.memory_space<vmem>>, vector<1x8x32xf32>,
    return
  }
  func.func @transform_0(%arg0: i32, %arg1: i32) -> (i32, i32, i32) {
    %c0_i32 = arith.constant 0 : i32
    %c0_i32_0 = arith.constant 0 : i32
    return %arg0, %arg1, %c0_i32 : i32, i32, i32
  }
  func.func @transform_1(%arg0: i32, %arg1: i32) -> (i32, i32, i32) {
    %c0_i32 = arith.constant 0 : i32
    %c0_i32_0 = arith.constant 0 : i32
    %c0_i32_1 = arith.constant 0 : i32
    return %arg0, %c0_i32, %c0_i32_0 : i32, i32, i32
  }
  func.func @transform_2(%arg0: i32, %arg1: i32) -> (i32, i32, i32) {
    %c0_i32 = arith.constant 0 : i32
    %c0_i32_0 = arith.constant 0 : i32
    %c0_i32_1 = arith.constant 0 : i32
    return %arg0, %c0_i32, %c0_i32_0 : i32, i32, i32
  }
  func.func @transform_3(%arg0: i32, %arg1: i32) -> (i32, i32, i32) {
    %c0_i32 = arith.constant 0 : i32
    %c0_i32_0 = arith.constant 0 : i32
    return %arg0, %arg1, %c0_i32 : i32, i32, i32
  }
  func.func @transform_4(%arg0: i32, %arg1: i32) -> (i32, i32, i32) {
    %c0_i32 = arith.constant 0 : i32
    %c0_i32_0 = arith.constant 0 : i32
    return %arg0, %arg1, %c0_i32 : i32, i32, i32
  }
  func.func @transform_5(%arg0: i32, %arg1: i32) -> (i32, i32, i32) {
    %c0_i32 = arith.constant 0 : i32
    %c0_i32_0 = arith.constant 0 : i32
    return %arg0, %arg1, %c0_i32 : i32, i32, i32
  }
  func.func @transform_6(%arg0: i32, %arg1: i32) -> (i32, i32, i32) {
    %c0_i32 = arith.constant 0 : i32
    %c0_i32_0 = arith.constant 0 : i32
    return %arg0, %arg1, %c0_i32 : i32, i32, i32
  }
}

</mosaic_0001>

<llo_original>
// kernel: tpu_custom_call.1
$region0: #{tpu_custom_call.1}
  #allocation0 [shape = 'u32[]', space=smem, size = 0x4, offset = 0x4, fixed_abs, tag = 'smem constant byte address 0x4 - core index']
  #allocation1 [shape = 'u32[72,128]{1,0:T(1,128)}', space=vmem, size = 0x9000, scoped, tag = 'internal scratch']
  %s0 = inlined_call_operand.hbm [shape: f32[2,8,32], index: 0, kind: input, shape index: {}]
  %s1 = inlined_call_operand.hbm [shape: f32[2,8,32], index: 1, kind: input, shape index: {}]
  %s2 = inlined_call_operand.hbm [shape: f32[2,8,32], index: 2, kind: input, shape index: {}]
  %s3 = inlined_call_operand.hbm [shape: s8[2,8,8], index: 3, kind: input, shape index: {}]
  %s4 = inlined_call_operand.hbm [shape: f32[2,8,32], index: 4, kind: output, shape index: {0}]
  %s5 = inlined_call_operand.hbm [shape: f32[2,8,8], index: 5, kind: output, shape index: {1}]
  %s6 = inlined_call_operand.hbm [shape: f32[2,8,8], index: 6, kind: output, shape index: {2}]
  %7 = xla_tuple %s4, %s5, %s6
  %s8 = sld [smem:[#allocation0]]
  $region81: #{tpu_custom_call.1} parent=0
    _
  %s10 = ssub.s32 1, %s8
  %s11 = scalar_select 0, %s10, %s8
  $region1: #{tpu_custom_call.1} parent=0
    #allocation2 [shape = 'u8[8192]{0}', space=vmem, size = 0x2000, scoped, tag = 'input window, operand 0']
    #allocation3 [shape = 's32[2]{0}', space=sflag, size = 0x8, scoped, tag = 'scoped memory for tpu_custom_call.1']
    #allocation4 [shape = 's32[2]{0}', space=sflag, size = 0x8, scoped, tag = 'scoped memory for tpu_custom_call.1']
    #allocation5 [shape = 'u8[8192]{0}', space=vmem, size = 0x2000, scoped, tag = 'input window, operand 1']
    #allocation6 [shape = 's32[2]{0}', space=sflag, size = 0x8, scoped, tag = 'scoped memory for tpu_custom_call.1']
    #allocation7 [shape = 'u8[8192]{0}', space=vmem, size = 0x2000, scoped, tag = 'input window, operand 2']
    #allocation8 [shape = 'u8[2048]{0}', space=vmem, size = 0x800, scoped, tag = 'input window, operand 3']
    #allocation9 [shape = 's32[2]{0}', space=sflag, size = 0x8, scoped, tag = 'scoped memory for tpu_custom_call.1']
    #allocation10 [shape = 'u8[8192]{0}', space=vmem, size = 0x2000, scoped, tag = 'output window, operand 0']
    #allocation11 [shape = 'u8[8192]{0}', space=vmem, size = 0x2000, scoped, tag = 'output window, operand 1']
    #allocation12 [shape = 's32[2]{0}', space=sflag, size = 0x8, scoped, tag = 'scoped memory for tpu_custom_call.1']
    #allocation13 [shape = 'u8[8192]{0}', space=vmem, size = 0x2000, scoped, tag = 'output window, operand 2']
    %12 = vsyncpa [#allocation3], 0
    %s13 = scalar_lea.sflag [#allocation3], 1
    %14 = vsyncpa %s13, 0
    %15 = vsyncpa [#allocation6], 0
    %s16 = scalar_lea.sflag [#allocation6], 1
    %17 = vsyncpa %s16, 0
    %18 = vsyncpa [#allocation9], 0
    %s19 = scalar_lea.sflag [#allocation9], 1
    %20 = vsyncpa %s19, 0
    %21 = vsyncpa [#allocation4], 0
    %s22 = scalar_lea.sflag [#allocation4], 1
    %23 = vsyncpa %s22, 0
    %24 = vsyncpa [#allocation12], 0
    %s25 = scalar_lea.sflag [#allocation12], 1
    %26 = vsyncpa %s25, 0
    loop: start=0, step=1, limit=4
    $region2: #{tpu_custom_call.1} parent=1 // loop_pre_header
      _
    $region3: #{tpu_custom_call.1} parent=1 // loop_header
      %s28 = sphi 0, %s32
      %p29 = scmp.ge.s32.totalorder %s28, 4
      %s35 = sphi 0, %s47
      %s36 = sphi 0, %s43
      %s37 = sphi 0, %s35
      %s38 = sphi 0, %s36
      %s39 = sphi 0, %s37
      %s40 = sphi 0, %s38
      %s52 = sphi 0, %s54
      %s55 = sphi 0, %s52
      %s56 = sphi 0, %s55
      %s72 = sphi 0, %s56
      %s78 = sphi 0, %s80
      %s81 = sphi 0, %s78
      %s82 = sphi 0, %s81
      %s98 = sphi 0, %s82
      %s104 = sphi 0, %s106
      %s107 = sphi 0, %s104
      %s108 = sphi 0, %s107
      %s124 = sphi 0, %s108
      %s132 = sphi 0, %s134
      %s135 = sphi 0, %s132
      %s136 = sphi 0, %s135
      %s152 = sphi 0, %s136
      %s160 = sphi 0, %s162
      %s163 = sphi 0, %s160
      %s164 = sphi 0, %s163
      %s180 = sphi 0, %s164
      %s188 = sphi 0, %s190
      %s191 = sphi 0, %s188
      %s192 = sphi 0, %s191
      %s208 = sphi 0, %s192
      %s216 = sphi 0, %s218
      %s219 = sphi 0, %s216
      %s220 = sphi 0, %s219
      %s236 = sphi 0, %s220
    $region4: #{tpu_custom_call.1} parent=1 // loop_header_branch
      %31 = sbr.rel (%p29) target = $region8
    $region5: #{tpu_custom_call.1} parent=1 // loop_body
      %s33 = ssub.s32 %s28, 1
      %s34 = ssub.s32 %s28, 2
      %s41 = sadd.s32 1, %s36
      %p42 = scmp.ge.s32.totalorder %s41, 1
      %s43 = scalar_select %p42, 0, %s41
      %s44 = sadd.s32 1, %s35
      %s45 = scalar_select %p42, %s44, %s35
      %p46 = scmp.ge.s32.totalorder %s45, 2
      %s47 = scalar_select %p46, 0, %s45
      %s48 = ssub.s32 %s35, %s47
      %s49 = ssub.s32 %s36, %s43
      %s50 = sor.u32 %s48, %s49
      %p51 = scmp.eq.s32.totalorder %s50, 0
      %s53 = sadd.s32 %s52, 1
      %s54 = scalar_select %p51, %s52, %s53
      %p57 = pneg %p51
      %p58 = scmp.eq.s32.totalorder %s28, 1
      %p59 = por %p57, %p58
      %p60 = scmp.ne.s32.totalorder %s52, %s55
      %p61 = scmp.eq.s32.totalorder %s28, 0
      %p62 = por %p60, %p61
      %p63 = scmp.ne.s32.totalorder %s52, %s55
      %p64 = scmp.eq.s32.totalorder %s33, 1
      %p65 = por %p63, %p64
      %p66 = scmp.ne.s32.totalorder %s55, %s56
      %p67 = scmp.eq.s32.totalorder %s33, 0
      %p68 = por %p66, %p67
      %p69 = scmp.ne.s32.totalorder %s55, %s56
      %p70 = scmp.eq.s32.totalorder %s34, 1
      %p71 = por %p69, %p70
      %p73 = scmp.ne.s32.totalorder %s56, %s72
      %p74 = scmp.eq.s32.totalorder %s34, 0
      %p75 = por %p73, %p74
      %s76 = ssub.s32 %s35, %s47
      %p77 = scmp.eq.s32.totalorder %s76, 0
      %s79 = sadd.s32 %s78, 1
      %s80 = scalar_select %p77, %s78, %s79
      %p83 = pneg %p77
      %p84 = scmp.eq.s32.totalorder %s28, 1
      %p85 = por %p83, %p84
      %p86 = scmp.ne.s32.totalorder %s78, %s81
      %p87 = scmp.eq.s32.totalorder %s28, 0
      %p88 = por %p86, %p87
      %p89 = scmp.ne.s32.totalorder %s78, %s81
      %p90 = scmp.eq.s32.totalorder %s33, 1
      %p91 = por %p89, %p90
      %p92 = scmp.ne.s32.totalorder %s81, %s82
      %p93 = scmp.eq.s32.totalorder %s33, 0
      %p94 = por %p92, %p93
      %p95 = scmp.ne.s32.totalorder %s81, %s82
      %p96 = scmp.eq.s32.totalorder %s34, 1
      %p97 = por %p95, %p96
      %p99 = scmp.ne.s32.totalorder %s82, %s98
      %p100 = scmp.eq.s32.totalorder %s34, 0
      %p101 = por %p99, %p100
      %s102 = ssub.s32 %s35, %s47
      %p103 = scmp.eq.s32.totalorder %s102, 0
      %s105 = sadd.s32 %s104, 1
      %s106 = scalar_select %p103, %s104, %s105
      %p109 = pneg %p103
      %p110 = scmp.eq.s32.totalorder %s28, 1
      %p111 = por %p109, %p110
      %p112 = scmp.ne.s32.totalorder %s104, %s107
      %p113 = scmp.eq.s32.totalorder %s28, 0
      %p114 = por %p112, %p113
      %p115 = scmp.ne.s32.totalorder %s104, %s107
      %p116 = scmp.eq.s32.totalorder %s33, 1
      %p117 = por %p115, %p116
      %p118 = scmp.ne.s32.totalorder %s107, %s108
      %p119 = scmp.eq.s32.totalorder %s33, 0
      %p120 = por %p118, %p119
      %p121 = scmp.ne.s32.totalorder %s107, %s108
      %p122 = scmp.eq.s32.totalorder %s34, 1
      %p123 = por %p121, %p122
      %p125 = scmp.ne.s32.totalorder %s108, %s124
      %p126 = scmp.eq.s32.totalorder %s34, 0
      %p127 = por %p125, %p126
      %s128 = ssub.s32 %s35, %s47
      %s129 = ssub.s32 %s36, %s43
      %s130 = sor.u32 %s128, %s129
      %p131 = scmp.eq.s32.totalorder %s130, 0
      %s133 = sadd.s32 %s132, 1
      %s134 = scalar_select %p131, %s132, %s133
      %p137 = pneg %p131
      %p138 = scmp.eq.s32.totalorder %s28, 1
      %p139 = por %p137, %p138
      %p140 = scmp.ne.s32.totalorder %s132, %s135
      %p141 = scmp.eq.s32.totalorder %s28, 0
      %p142 = por %p140, %p141
      %p143 = scmp.ne.s32.totalorder %s132, %s135
      %p144 = scmp.eq.s32.totalorder %s33, 1
      %p145 = por %p143, %p144
      %p146 = scmp.ne.s32.totalorder %s135, %s136
      %p147 = scmp.eq.s32.totalorder %s33, 0
      %p148 = por %p146, %p147
      %p149 = scmp.ne.s32.totalorder %s135, %s136
      %p150 = scmp.eq.s32.totalorder %s34, 1
      %p151 = por %p149, %p150
      %p153 = scmp.ne.s32.totalorder %s136, %s152
      %p154 = scmp.eq.s32.totalorder %s34, 0
      %p155 = por %p153, %p154
      %s156 = ssub.s32 %s35, %s47
      %s157 = ssub.s32 %s36, %s43
      %s158 = sor.u32 %s156, %s157
      %p159 = scmp.eq.s32.totalorder %s158, 0
      %s161 = sadd.s32 %s160, 1
      %s162 = scalar_select %p159, %s160, %s161
      %p165 = pneg %p159
      %p166 = scmp.eq.s32.totalorder %s28, 1
      %p167 = por %p165, %p166
      %p168 = scmp.ne.s32.totalorder %s160, %s163
      %p169 = scmp.eq.s32.totalorder %s28, 0
      %p170 = por %p168, %p169
      %p171 = scmp.ne.s32.totalorder %s160, %s163
      %p172 = scmp.eq.s32.totalorder %s33, 1
      %p173 = por %p171, %p172
      %p174 = scmp.ne.s32.totalorder %s163, %s164
      %p175 = scmp.eq.s32.totalorder %s33, 0
      %p176 = por %p174, %p175
      %p177 = scmp.ne.s32.totalorder %s163, %s164
      %p178 = scmp.eq.s32.totalorder %s34, 1
      %p179 = por %p177, %p178
      %p181 = scmp.ne.s32.totalorder %s164, %s180
      %p182 = scmp.eq.s32.totalorder %s34, 0
      %p183 = por %p181, %p182
      %s184 = ssub.s32 %s35, %s47
      %s185 = ssub.s32 %s36, %s43
      %s186 = sor.u32 %s184, %s185
      %p187 = scmp.eq.s32.totalorder %s186, 0
      %s189 = sadd.s32 %s188, 1
      %s190 = scalar_select %p187, %s188, %s189
      %p193 = pneg %p187
      %p194 = scmp.eq.s32.totalorder %s28, 1
      %p195 = por %p193, %p194
      %p196 = scmp.ne.s32.totalorder %s188, %s191
      %p197 = scmp.eq.s32.totalorder %s28, 0
      %p198 = por %p196, %p197
      %p199 = scmp.ne.s32.totalorder %s188, %s191
      %p200 = scmp.eq.s32.totalorder %s33, 1
      %p201 = por %p199, %p200
      %p202 = scmp.ne.s32.totalorder %s191, %s192
      %p203 = scmp.eq.s32.totalorder %s33, 0
      %p204 = por %p202, %p203
      %p205 = scmp.ne.s32.totalorder %s191, %s192
      %p206 = scmp.eq.s32.totalorder %s34, 1
      %p207 = por %p205, %p206
      %p209 = scmp.ne.s32.totalorder %s192, %s208
      %p210 = scmp.eq.s32.totalorder %s34, 0
      %p211 = por %p209, %p210
      %s212 = ssub.s32 %s35, %s47
      %s213 = ssub.s32 %s36, %s43
      %s214 = sor.u32 %s212, %s213
      %p215 = scmp.eq.s32.totalorder %s214, 0
      %s217 = sadd.s32 %s216, 1
      %s218 = scalar_select %p215, %s216, %s217
      %p221 = pneg %p215
      %p222 = scmp.eq.s32.totalorder %s28, 1
      %p223 = por %p221, %p222
      %p224 = scmp.ne.s32.totalorder %s216, %s219
      %p225 = scmp.eq.s32.totalorder %s28, 0
      %p226 = por %p224, %p225
      %p227 = scmp.ne.s32.totalorder %s216, %s219
      %p228 = scmp.eq.s32.totalorder %s33, 1
      %p229 = por %p227, %p228
      %p230 = scmp.ne.s32.totalorder %s219, %s220
      %p231 = scmp.eq.s32.totalorder %s33, 0
      %p232 = por %p230, %p231
      %p233 = scmp.ne.s32.totalorder %s219, %s220
      %p234 = scmp.eq.s32.totalorder %s34, 1
      %p235 = por %p233, %p234
      %p237 = scmp.ne.s32.totalorder %s220, %s236
      %p238 = scmp.eq.s32.totalorder %s34, 0
      %p239 = por %p237, %p238
      %p240 = scmp.le.s32.totalorder 1, %s28
      %p241 = scmp.lt.s32.totalorder %s28, 3
      %p242 = pnand %p240, %p241
      %p243 = pneg %p242
      // Predicated region
      $region9: #{tpu_custom_call.1} parent=5 // pred_check
        _
      $region10: #{tpu_custom_call.1} parent=5 // pred_check_branch
        %245 = sbr.rel (%p242) target = $region12
      $region11: #{tpu_custom_call.1} parent=5 // pred_region
        %s246 = ssub.s32 %s28, 1
      $region12: #{tpu_custom_call.1} parent=5 // pred_fallthru
        _
      %p247 = scmp.lt.s32.totalorder %s28, 2
      // Predicated region
      $region13: #{tpu_custom_call.1} parent=5 // pred_check
        %p248 = pneg %p247
      $region14: #{tpu_custom_call.1} parent=5 // pred_check_branch
        %250 = sbr.rel (%p248) target = $region16
      $region15: #{tpu_custom_call.1} parent=5 // pred_region
        // Predicated region
        $region17: #{tpu_custom_call.1} parent=15 // pred_check
          %p251 = pneg %p62
        $region18: #{tpu_custom_call.1} parent=15 // pred_check_branch
          %253 = sbr.rel (%p251) target = $region20
        $region19: #{tpu_custom_call.1} parent=15 // pred_region
          %s254 = sand.u32 %s52, 1
          %s255 = scalar_lea.sflag [#allocation3], %s254
          %s256 = sand.u32 %s52, 1
          %s257 = smul.addr %s256, 8
          %s258 = scalar_lea.vmem [#allocation2], %s257
          %260 = vsyncadd %s255, 0
          %s261 = sadd.s32 %s36, %s35
          %s262 = smul.addr %s261, 8
          %s263 = scalar_lea.hbm %s0, %s262
          %s265 = sshll.u32 %s263, 4
          %s266 = int_to_ptr.hbm [resolvable:$true] %s265
          %s267 = sshll.u32 %s258, 4
          %s268 = int_to_ptr.vmem [resolvable:$true] %s267
          %270 = dma.hbm_to_vmem [thread:$0]  %s266, 128, %s268, %s255
        $region20: #{tpu_custom_call.1} parent=15 // pred_fallthru
          _
        // Predicated region
        $region21: #{tpu_custom_call.1} parent=15 // pred_check
          %p271 = pneg %p88
        $region22: #{tpu_custom_call.1} parent=15 // pred_check_branch
          %273 = sbr.rel (%p271) target = $region24
        $region23: #{tpu_custom_call.1} parent=15 // pred_region
          %s274 = sand.u32 %s28, 1
          %s275 = scalar_lea.sflag [#allocation6], %s274
          %s276 = sand.u32 %s78, 1
          %s277 = smul.addr %s276, 8
          %s278 = scalar_lea.vmem [#allocation5], %s277
          %280 = vsyncadd %s275, 0
          %s281 = smul.addr %s35, 8
          %s282 = scalar_lea.hbm %s1, %s281
          %s284 = sshll.u32 %s282, 4
          %s285 = int_to_ptr.hbm [resolvable:$true] %s284
          %s286 = sshll.u32 %s278, 4
          %s287 = int_to_ptr.vmem [resolvable:$true] %s286
          %289 = dma.hbm_to_vmem [thread:$0]  %s285, 128, %s287, %s275
        $region24: #{tpu_custom_call.1} parent=15 // pred_fallthru
          _
        // Predicated region
        $region25: #{tpu_custom_call.1} parent=15 // pred_check
          %p290 = pneg %p114
        $region26: #{tpu_custom_call.1} parent=15 // pred_check_branch
          %292 = sbr.rel (%p290) target = $region28
        $region27: #{tpu_custom_call.1} parent=15 // pred_region
          %s293 = sand.u32 %s28, 1
          %s294 = scalar_lea.sflag [#allocation6], %s293
          %s295 = sand.u32 %s104, 1
          %s296 = smul.addr %s295, 8
          %s297 = scalar_lea.vmem [#allocation7], %s296
          %299 = vsyncadd %s294, 0
          %s300 = smul.addr %s35, 8
          %s301 = scalar_lea.hbm %s2, %s300
          %s303 = sshll.u32 %s301, 4
          %s304 = int_to_ptr.hbm [resolvable:$true] %s303
          %s305 = sshll.u32 %s297, 4
          %s306 = int_to_ptr.vmem [resolvable:$true] %s305
          %308 = dma.hbm_to_vmem [thread:$0]  %s304, 128, %s306, %s294
        $region28: #{tpu_custom_call.1} parent=15 // pred_fallthru
          _
        // Predicated region
        $region29: #{tpu_custom_call.1} parent=15 // pred_check
          %p309 = pneg %p142
        $region30: #{tpu_custom_call.1} parent=15 // pred_check_branch
          %311 = sbr.rel (%p309) target = $region32
        $region31: #{tpu_custom_call.1} parent=15 // pred_region
          %s312 = sand.u32 %s132, 1
          %s313 = scalar_lea.sflag [#allocation9], %s312
          %s314 = sand.u32 %s132, 1
          %s315 = smul.addr %s314, 2
          %s316 = scalar_lea.vmem [#allocation8], %s315
          %318 = vsyncadd %s313, 0
          %s319 = sadd.s32 %s36, %s35
          %s320 = smul.addr %s319, 2
          %s321 = scalar_lea.hbm %s3, %s320
          %s323 = sshll.u32 %s321, 4
          %s324 = int_to_ptr.hbm [resolvable:$true] %s323
          %s325 = sshll.u32 %s316, 4
          %s326 = int_to_ptr.vmem [resolvable:$true] %s325
          %328 = dma.hbm_to_vmem [thread:$0]  %s324, 32, %s326, %s313
        $region32: #{tpu_custom_call.1} parent=15 // pred_fallthru
          _
      $region16: #{tpu_custom_call.1} parent=5 // pred_fallthru
        _
      %p329 = scmp.le.s32.totalorder 1, %s28
      %p330 = scmp.lt.s32.totalorder %s28, 3
      %p331 = pnand %p329, %p330
      %p332 = pneg %p331
      // Predicated region
      $region33: #{tpu_custom_call.1} parent=5 // pred_check
        _
      $region34: #{tpu_custom_call.1} parent=5 // pred_check_branch
        %334 = sbr.rel (%p331) target = $region36
      $region35: #{tpu_custom_call.1} parent=5 // pred_region
        %s335 = ssub.s32 %s28, 1
        %s336 = sand.u32 %s55, 1
        %s337 = scalar_lea.sflag [#allocation3], %s336
        %s338 = sand.u32 %s55, 1
        %s339 = smul.addr %s338, 8
        %s340 = scalar_lea.vmem [#allocation2], %s339
        // Predicated region
        $region37: #{tpu_custom_call.1} parent=35 // pred_check
          %p341 = pneg %p68
        $region38: #{tpu_custom_call.1} parent=35 // pred_check_branch
          %343 = sbr.rel (%p341) target = $region40
        $region39: #{tpu_custom_call.1} parent=35 // pred_region
          %345 = dma.done %s337, 128
        $region40: #{tpu_custom_call.1} parent=35 // pred_fallthru
          _
        %s346 = sand.u32 %s33, 1
        %s347 = scalar_lea.sflag [#allocation6], %s346
        %s348 = sand.u32 %s81, 1
        %s349 = smul.addr %s348, 8
        %s350 = scalar_lea.vmem [#allocation5], %s349
        // Predicated region
        $region41: #{tpu_custom_call.1} parent=35 // pred_check
          %p351 = pneg %p94
        $region42: #{tpu_custom_call.1} parent=35 // pred_check_branch
          %353 = sbr.rel (%p351) target = $region44
        $region43: #{tpu_custom_call.1} parent=35 // pred_region
          %355 = dma.done %s347, 128
        $region44: #{tpu_custom_call.1} parent=35 // pred_fallthru
          _
        %s356 = sand.u32 %s33, 1
        %s357 = scalar_lea.sflag [#allocation6], %s356
        %s358 = sand.u32 %s107, 1
        %s359 = smul.addr %s358, 8
        %s360 = scalar_lea.vmem [#allocation7], %s359
        // Predicated region
        $region45: #{tpu_custom_call.1} parent=35 // pred_check
          %p361 = pneg %p120
        $region46: #{tpu_custom_call.1} parent=35 // pred_check_branch
          %363 = sbr.rel (%p361) target = $region48
        $region47: #{tpu_custom_call.1} parent=35 // pred_region
          %365 = dma.done %s357, 128
        $region48: #{tpu_custom_call.1} parent=35 // pred_fallthru
          _
        %s366 = sand.u32 %s135, 1
        %s367 = scalar_lea.sflag [#allocation9], %s366
        %s368 = sand.u32 %s135, 1
        %s369 = smul.addr %s368, 2
        %s370 = scalar_lea.vmem [#allocation8], %s369
        // Predicated region
        $region49: #{tpu_custom_call.1} parent=35 // pred_check
          %p371 = pneg %p148
        $region50: #{tpu_custom_call.1} parent=35 // pred_check_branch
          %373 = sbr.rel (%p371) target = $region52
        $region51: #{tpu_custom_call.1} parent=35 // pred_region
          %375 = dma.done %s367, 32
        $region52: #{tpu_custom_call.1} parent=35 // pred_fallthru
          _
        %s376 = sand.u32 %s55, 1
        %s377 = scalar_lea.sflag [#allocation3], %s376
        %s378 = sand.u32 %s55, 1
        %s379 = smul.addr %s378, 8
        %s380 = scalar_lea.vmem [#allocation2], %s379
        %p381 = pneg %p68
        %p382 = pneg %p65
        %s383 = sand.u32 %s33, 1
        %s384 = scalar_lea.sflag [#allocation6], %s383
        %s385 = sand.u32 %s81, 1
        %s386 = smul.addr %s385, 8
        %s387 = scalar_lea.vmem [#allocation5], %s386
        %p388 = pneg %p94
        %p389 = pneg %p91
        %s390 = sand.u32 %s33, 1
        %s391 = scalar_lea.sflag [#allocation6], %s390
        %s392 = sand.u32 %s107, 1
        %s393 = smul.addr %s392, 8
        %s394 = scalar_lea.vmem [#allocation7], %s393
        %p395 = pneg %p120
        %p396 = pneg %p117
        %s397 = sand.u32 %s135, 1
        %s398 = scalar_lea.sflag [#allocation9], %s397
        %s399 = sand.u32 %s135, 1
        %s400 = smul.addr %s399, 2
        %s401 = scalar_lea.vmem [#allocation8], %s400
        %p402 = pneg %p148
        %p403 = pneg %p145
        %p404 = pneg %p176
        %p405 = pneg %p173
        %s406 = sand.u32 %s163, 1
        %s407 = scalar_lea.sflag [#allocation4], %s406
        %s408 = sand.u32 %s163, 1
        %s409 = smul.addr %s408, 8
        %s410 = scalar_lea.vmem [#allocation10], %s409
        %p411 = pneg %p204
        %p412 = pneg %p201
        %s413 = sand.u32 %s33, 1
        %s414 = scalar_lea.sflag [#allocation12], %s413
        %s415 = sand.u32 %s191, 1
        %s416 = smul.addr %s415, 8
        %s417 = scalar_lea.vmem [#allocation11], %s416
        %p418 = pneg %p232
        %p419 = pneg %p229
        %s420 = sand.u32 %s33, 1
        %s421 = scalar_lea.sflag [#allocation12], %s420
        %s422 = sand.u32 %s219, 1
        %s423 = smul.addr %s422, 8
        %s424 = scalar_lea.vmem [#allocation13], %s423
        %v427 = vld [vmem:[%s340] sm:$0xff]
        %v428 = vmul.f32 %v427, 0.17677669
        %v429 = vld [vmem:[%s350] sm:$0xff]
        %v430 = vld [vmem:[%s360] sm:$0xff]
        %vm431 = vcmask 261120
        %v433 = vsel %vm431, %v428, 0
        %v436 = vsel %vm431, %v429, 0
        %438 = vmatpush.xpose.msra.mxu0 0.0
        %439 = vmatpush.xpose.msra.mxu0 0.0
        %440 = vmatpush.xpose.msra.mxu0 0.0
        %441 = vmatpush.xpose.msra.mxu0 0.0
        %442 = vmatpush.xpose.msra.mxu0 0.0
        %443 = vmatpush.xpose.msra.mxu0 0.0
        %444 = vmatpush.xpose.msra.mxu0 0.0
        %445 = vmatpush.xpose.msra.mxu0 0.0
        %446 = vmatpush.xpose.msra.mxu0 0.0
        %447 = vmatpush.xpose.msra.mxu0 0.0
        %448 = vmatpush.xpose.msra.mxu0 0.0
        %449 = vmatpush.xpose.msra.mxu0 0.0
        %450 = vmatpush.xpose.msra.mxu0 0.0
        %451 = vmatpush.xpose.msra.mxu0 0.0
        %452 = vmatpush.xpose.msra.mxu0 0.0
        %453 = vmatpush.xpose.msra.mxu0 %v436
        %454 = vmatmul.f32.gmra.mxu0 %v433
        %v455 = vpop.f32.mrf.mxu0
        %v456 = vadd.f32 0.0, %v455
        %457 = vdwg.mxu0
        %v458 = vld [vmem:[%s370] sm:$0x3]
        %vm459 = vnez %v458
        %v460 = vsel %vm459, 16843009, 0
        %v461 = vunpack.c.0.s8 %v460
        %vm462 = vcmp.ne.s32.totalorder %v461, 0
        %v463 = vsel %vm462, -inf, %v456
        %vm464 = vcmask 64512
        %465 = vst.msk [vmem:[%s417] sm:$0xff] %vm464, %v463
        %v466 = vsel %vm464, %v463, -inf
        %467 = vmax.xlane.f32.xlu0 %v466
        %v468 = vpop.xlane.xlu0 %467
        %v469 = vsub.f32 %v463, %v468
        %v470 = vmul.f32 %v469, 1.442695
        %v471 = vpow.pop %v470
        %v472 = vsel %vm464, %v471, 0.0
        %473 = vadd.xlane.f32.xlu0 %v472
        %v474 = vpop.xlane.xlu0 %473
        %v475 = vrcp.pop %v474
        %v476 = vmul.f32 %v474, %v475
        %v477 = vsub.f32 1.0, %v476
        %v478 = vmul.f32 %v475, %v477
        %v479 = vadd.f32 %v475, %v478
        %vm480 = vweird.f32 %v474
        %vm481 = vweird.f32 %v475
        %vm482 = vmor %vm480, %vm481
        %v483 = vsel %vm482, %v475, %v479
        %v484 = vand.u32 2147483647, %v474
        %vm485 = vcmp.eq.f32.partialorder %v484, 8.507059e+37
        %v486 = vand.u32 %v474, 2147483648
        %v487 = vor.u32 1.1754944e-38, %v486
        %v488 = vsel %vm485, %v487, %v483
        %v489 = vmul.f32 %v471, %v488
        %490 = vst.msk [vmem:[%s424] sm:$0xff] %vm464, %v489
        %v492 = vsel %vm464, %v489, 0
        %494 = vmatpush.msra.mxu0 0.0
        %495 = vmatpush.msra.mxu0 0.0
        %496 = vmatpush.msra.mxu0 0.0
        %497 = vmatpush.msra.mxu0 0.0
        %498 = vmatpush.msra.mxu0 0.0
        %499 = vmatpush.msra.mxu0 0.0
        %500 = vmatpush.msra.mxu0 0.0
        %501 = vmatpush.msra.mxu0 0.0
        %502 = vmatpush.msra.mxu0 0.0
        %503 = vmatpush.msra.mxu0 0.0
        %504 = vmatpush.msra.mxu0 0.0
        %505 = vmatpush.msra.mxu0 0.0
        %506 = vmatpush.msra.mxu0 0.0
        %507 = vmatpush.msra.mxu0 0.0
        %508 = vmatpush.msra.mxu0 0.0
        %509 = vmatpush.msra.mxu0 %v430
        %510 = vmatmul.f32.gmra.mxu0 %v492
        %v511 = vpop.f32.mrf.mxu0
        %v512 = vadd.f32 0.0, %v511
        %513 = vdwg.mxu0
        %514 = vst.msk [vmem:[%s410] sm:$0xff] %vm431, %v512
        %s515 = sand.u32 %s163, 1
        %s516 = scalar_lea.sflag [#allocation4], %s515
        %s517 = sand.u32 %s163, 1
        %s518 = smul.addr %s517, 8
        %s519 = scalar_lea.vmem [#allocation10], %s518
        %s520 = sand.u32 %s33, 1
        %s521 = scalar_lea.sflag [#allocation12], %s520
        %s522 = sand.u32 %s191, 1
        %s523 = smul.addr %s522, 8
        %s524 = scalar_lea.vmem [#allocation11], %s523
        %s525 = sand.u32 %s33, 1
        %s526 = scalar_lea.sflag [#allocation12], %s525
        %s527 = sand.u32 %s219, 1
        %s528 = smul.addr %s527, 8
        %s529 = scalar_lea.vmem [#allocation13], %s528
        // Predicated region
        $region53: #{tpu_custom_call.1} parent=35 // pred_check
          %p530 = pneg %p173
        $region54: #{tpu_custom_call.1} parent=35 // pred_check_branch
          %532 = sbr.rel (%p530) target = $region56
        $region55: #{tpu_custom_call.1} parent=35 // pred_region
          %534 = vsyncadd %s516, 0
          %s535 = sadd.s32 %s38, %s37
          %s536 = smul.addr %s535, 8
          %s537 = scalar_lea.hbm %s4, %s536
          %s539 = sshll.u32 %s519, 4
          %s540 = int_to_ptr.vmem [resolvable:$true] %s539
          %s541 = sshll.u32 %s537, 4
          %s542 = int_to_ptr.hbm [resolvable:$true] %s541
          %544 = dma.vmem_to_hbm [thread:$0]  %s540, 128, %s542, %s516
        $region56: #{tpu_custom_call.1} parent=35 // pred_fallthru
          _
        // Predicated region
        $region57: #{tpu_custom_call.1} parent=35 // pred_check
          %p545 = pneg %p201
        $region58: #{tpu_custom_call.1} parent=35 // pred_check_branch
          %547 = sbr.rel (%p545) target = $region60
        $region59: #{tpu_custom_call.1} parent=35 // pred_region
          %549 = vsyncadd %s521, 0
          %s550 = sadd.s32 %s38, %s37
          %s551 = smul.addr %s550, 8
          %s552 = scalar_lea.hbm %s5, %s551
          %s554 = sshll.u32 %s524, 4
          %s555 = int_to_ptr.vmem [resolvable:$true] %s554
          %s556 = sshll.u32 %s552, 4
          %s557 = int_to_ptr.hbm [resolvable:$true] %s556
          %559 = dma.vmem_to_hbm [thread:$0]  %s555, 128, %s557, %s521
        $region60: #{tpu_custom_call.1} parent=35 // pred_fallthru
          _
        // Predicated region
        $region61: #{tpu_custom_call.1} parent=35 // pred_check
          %p560 = pneg %p229
        $region62: #{tpu_custom_call.1} parent=35 // pred_check_branch
          %562 = sbr.rel (%p560) target = $region64
        $region63: #{tpu_custom_call.1} parent=35 // pred_region
          %564 = vsyncadd %s526, 0
          %s565 = sadd.s32 %s38, %s37
          %s566 = smul.addr %s565, 8
          %s567 = scalar_lea.hbm %s6, %s566
          %s569 = sshll.u32 %s529, 4
          %s570 = int_to_ptr.vmem [resolvable:$true] %s569
          %s571 = sshll.u32 %s567, 4
          %s572 = int_to_ptr.hbm [resolvable:$true] %s571
          %574 = dma.vmem_to_hbm [thread:$0]  %s570, 128, %s572, %s526
        $region64: #{tpu_custom_call.1} parent=35 // pred_fallthru
          _
      $region36: #{tpu_custom_call.1} parent=5 // pred_fallthru
        _
      %p575 = scmp.le.s32.totalorder 2, %s28
      // Predicated region
      $region65: #{tpu_custom_call.1} parent=5 // pred_check
        %p576 = pneg %p575
      $region66: #{tpu_custom_call.1} parent=5 // pred_check_branch
        %578 = sbr.rel (%p576) target = $region68
      $region67: #{tpu_custom_call.1} parent=5 // pred_region
        %s579 = ssub.s32 %s28, 2
        // Predicated region
        $region69: #{tpu_custom_call.1} parent=67 // pred_check
          %p580 = pneg %p179
        $region70: #{tpu_custom_call.1} parent=67 // pred_check_branch
          %582 = sbr.rel (%p580) target = $region72
        $region71: #{tpu_custom_call.1} parent=67 // pred_region
          %s583 = sand.u32 %s164, 1
          %s584 = scalar_lea.sflag [#allocation4], %s583
          %s585 = sand.u32 %s164, 1
          %s586 = smul.addr %s585, 8
          %s587 = scalar_lea.vmem [#allocation10], %s586
          %589 = dma.done %s584, 128
        $region72: #{tpu_custom_call.1} parent=67 // pred_fallthru
          _
        // Predicated region
        $region73: #{tpu_custom_call.1} parent=67 // pred_check
          %p590 = pneg %p207
        $region74: #{tpu_custom_call.1} parent=67 // pred_check_branch
          %592 = sbr.rel (%p590) target = $region76
        $region75: #{tpu_custom_call.1} parent=67 // pred_region
          %s593 = sand.u32 %s34, 1
          %s594 = scalar_lea.sflag [#allocation12], %s593
          %s595 = sand.u32 %s192, 1
          %s596 = smul.addr %s595, 8
          %s597 = scalar_lea.vmem [#allocation11], %s596
          %599 = dma.done %s594, 128
        $region76: #{tpu_custom_call.1} parent=67 // pred_fallthru
          _
        // Predicated region
        $region77: #{tpu_custom_call.1} parent=67 // pred_check
          %p600 = pneg %p235
        $region78: #{tpu_custom_call.1} parent=67 // pred_check_branch
          %602 = sbr.rel (%p600) target = $region80
        $region79: #{tpu_custom_call.1} parent=67 // pred_region
          %s603 = sand.u32 %s34, 1
          %s604 = scalar_lea.sflag [#allocation12], %s603
          %s605 = sand.u32 %s220, 1
          %s606 = smul.addr %s605, 8
          %s607 = scalar_lea.vmem [#allocation13], %s606
          %609 = dma.done %s604, 128
        $region80: #{tpu_custom_call.1} parent=67 // pred_fallthru
          _
      $region68: #{tpu_custom_call.1} parent=5 // pred_fallthru
        _
    $region6: #{tpu_custom_call.1} parent=1 // loop_footer
      %s32 = sadd.s32 1, %s28
    $region7: #{tpu_custom_call.1} parent=1 // loop_footer_branch
      %27 = sbr.rel target = $region3
    $region8: #{tpu_custom_call.1} parent=1 // loop_exit
      _
    %610 = vsyncpa [#allocation3], 1
    %s611 = scalar_lea.sflag [#allocation3], 1
    %612 = vsyncpa %s611, 1
    %613 = vsyncpa [#allocation6], 1
    %s614 = scalar_lea.sflag [#allocation6], 1
    %615 = vsyncpa %s614, 1
    %616 = vsyncpa [#allocation9], 1
    %s617 = scalar_lea.sflag [#allocation9], 1
    %618 = vsyncpa %s617, 1
    %619 = vsyncpa [#allocation4], 1
    %s620 = scalar_lea.sflag [#allocation4], 1
    %621 = vsyncpa %s620, 1
    %622 = vsyncpa [#allocation12], 1
    %s623 = scalar_lea.sflag [#allocation12], 1
    %624 = vsyncpa %s623, 1

</llo_original>
